<compile_context>
chip_gen: v7x
topology: tpu7x:2x2x1
jax: 0.10.0
libtpu: 0.0.40
codegen_flags: <defaults>
</compile_context>

<pallas_src>
import jax
import jax.numpy as jnp
from jax.experimental import pallas as pl
from jax.experimental.pallas import tpu as pltpu


def _glove_encoder_kernel(ids_ref, mask_ref, table_ref, emb_ref, sum_ref):
    # ids_ref  : SMEM (Bp, S) int32   -- scalar-prefetched token ids (full array)
    # mask_ref : SMEM (Bp, S) int32   -- 1 iff token is in-vocab and not a stop word
    # table_ref: VMEM (Vp, Dp) f32    -- padded embedding table (resident, constant block)
    # emb_ref  : VMEM (TB, S, Dp) f32 -- per-token embeddings for this batch tile
    # sum_ref  : VMEM (TB, 1, Dp) f32 -- masked-mean summaries for this batch tile
    TB, S, Dp = emb_ref.shape
    bt = pl.program_id(0)

    # Small static loops (short padded queries); gather + accumulate fused so the
    # (TB, S, Dp) block is touched exactly once.
    for bb in range(TB):
        b = bt * TB + bb
        acc = jnp.zeros((1, Dp), jnp.float32)
        cnt = jnp.zeros((1, 1), jnp.float32)
        for s in range(S):
            tok = ids_ref[b, s]                       # scalar from SMEM
            row = table_ref[pl.ds(tok, 1), :]         # (1, Dp) dynamic row gather
            emb_ref[bb, s:s + 1, :] = row
            m = mask_ref[b, s].astype(jnp.float32)    # scalar 0/1
            acc = acc + m * row
            cnt = cnt + m
        # Guarded mean: cnt==0 (all masked / padding rows) -> zeros instead of NaN.
        inv = pl.reciprocal(jnp.maximum(cnt, 1.0))    # EUP; exact (approx=False)
        sum_ref[bb, :, :] = acc * inv


def glove_encoder_forward(tok_ids, table, summary_mask, *, batch_tile=2):
    """tok_ids: (B, S) int32, table: (V, D) f32, summary_mask: (B, S) {0,1}.

    Returns (summaries (B, D), embedded_toks (B, S, D)) -- the two tensors the
    PyTorch forward returns (its third return value is the host-side token
    list and has no tensor equivalent)."""
    B, S = tok_ids.shape
    V, D = table.shape

    Dp = ((D + 127) // 128) * 128          # lane-dense last dim (unmasked vst)
    Vp = ((V + 7) // 8) * 8                # sublane-aligned vocab
    TB = max(1, min(batch_tile, B))        # batch tile
    Bp = ((B + TB - 1) // TB) * TB         # padded batch (mask=0 rows -> zeros)

    table_p = jnp.zeros((Vp, Dp), jnp.float32).at[:V, :D].set(
        table.astype(jnp.float32))
    # Unknown/out-of-range ids are clipped; callers should map OOV words to a
    # dedicated UNK row (matching get_vec(always_return_vec=True)).
    ids_p = jnp.zeros((Bp, S), jnp.int32).at[:B, :].set(
        jnp.clip(tok_ids.astype(jnp.int32), 0, V - 1))
    mask_p = jnp.zeros((Bp, S), jnp.int32).at[:B, :].set(
        (summary_mask > 0).astype(jnp.int32))

    grid = (Bp // TB,)

    # VMEM budget: resident table + double-buffered output blocks (+ headroom).
    vmem_need = (Vp * Dp * 4) + 2 * (TB * S * Dp * 4) + 2 * (TB * Dp * 4)
    vmem_limit = int(min(64 * 1024 * 1024, max(2 * vmem_need + (1 << 20),
                                               4 * 1024 * 1024)))

    cost = pl.CostEstimate(
        flops=int(2 * Bp * S * Dp + Bp * Dp),
        transcendentals=int(Bp),
        bytes_accessed=int(ids_p.size * 4 + mask_p.size * 4 + Vp * Dp * 4
                           + Bp * S * Dp * 4 + Bp * Dp * 4),
    )

    emb_p, sum_p = pl.pallas_call(
        _glove_encoder_kernel,
        grid_spec=pltpu.PrefetchScalarGridSpec(
            num_scalar_prefetch=2,                      # (tok_ids, mask) -> SMEM
            grid=grid,
            in_specs=[
                # Whole (padded) table; constant block index -> fetched once,
                # stays resident in VMEM across the batch grid.
                pl.BlockSpec((Vp, Dp), lambda i, ids, msk: (0, 0)),
            ],
            out_specs=(
                pl.BlockSpec((TB, S, Dp), lambda i, ids, msk: (i, 0, 0)),
                pl.BlockSpec((TB, 1, Dp), lambda i, ids, msk: (i, 0, 0)),
            ),
        ),
        out_shape=(
            jax.ShapeDtypeStruct((Bp, S, Dp), jnp.float32),
            jax.ShapeDtypeStruct((Bp, 1, Dp), jnp.float32),
        ),
        compiler_params=pltpu.CompilerParams(
            dimension_semantics=("parallel",),          # megacore-shardable
            vmem_limit_bytes=vmem_limit,
        ),
        cost_estimate=cost,
    )(ids_p, mask_p, table_p)

    summaries = sum_p[:B, 0, :D]
    embedded = emb_p[:B, :, :D]
    return summaries, embedded


if __name__ == "__main__":
    # Small shapes consistent with the module: batch B=8, seq_len S=8,
    # vocab V=64 (incl. UNK rows), dims D=50 (the module default).
    B, S, V, D = 8, 8, 64, 50
    key = jax.random.PRNGKey(0)
    k_tab, k_ids, k_mask = jax.random.split(key, 3)

    # Deterministic synthetic "GloVe" table.
    table = jax.random.normal(k_tab, (V, D), dtype=jnp.float32)
    # Token ids of the padded tokenized batch.
    tok_ids = jax.random.randint(k_ids, (B, S), 0, V, dtype=jnp.int32)
    # Mask: 1.0 iff word is in the glove vocab and not a stop word.
    summary_mask = (jax.random.uniform(k_mask, (B, S)) > 0.3).astype(jnp.float32)
    summary_mask = summary_mask.at[:, 0].set(1.0)   # avoid 0/0 rows (as in torch)

    summaries, embedded = glove_encoder_forward(tok_ids, table, summary_mask,
                                                batch_tile=2)
    jax.block_until_ready((summaries, embedded))

    # Pure-JAX reference.
    ref_embedded = jnp.take(table, tok_ids, axis=0)                      # (B,S,D)
    ref_sum = (summary_mask[:, :, None] * ref_embedded).sum(axis=1)
    ref_sum = ref_sum / summary_mask.sum(axis=1, keepdims=True)          # (B,D)

    assert embedded.shape == (B, S, D) and summaries.shape == (B, D)
    assert jnp.allclose(embedded, ref_embedded, atol=1e-5, rtol=1e-5)
    assert jnp.allclose(summaries, ref_sum, atol=1e-4, rtol=1e-4)
    print("KERNEL_OK")
</pallas_src>

<mosaic_0001>
module attributes {stable_mosaic.version = 11 : i64} {
  func.func @_glove_encoder_kernel(%arg0: i32, %arg1: memref<8x8xi32, #tpu.memory_space<smem>>, %arg2: memref<8x8xi32, #tpu.memory_space<smem>>, %arg3: memref<64x128xf32, #tpu.memory_space<vmem>>, %arg4: memref<2x8x128xf32, #tpu.memory_space<vmem>>, %arg5: memref<2x1x128xf32, #tpu.memory_space<vmem>>) attributes {dimension_semantics = [#tpu.dimension_semantics<parallel>], iteration_bounds = array<i64: 4>, scalar_prefetch = 2 : i64, scratch_operands = 0 : i64, tpu.core_type = #tpu.core_type<tc>, window_params = [{pipeline_mode = #tpu.pipeline_mode<synchronous>, transform_indices = @transform_0, window_bounds = array<i64: 64, 128>}, {transform_indices = @transform_1, window_bounds = array<i64: 2, 8, 128>}, {transform_indices = @transform_2, window_bounds = array<i64: 2, 1, 128>}]} {
    %c2_i32 = arith.constant 2 : i32
    %0 = arith.muli %arg0, %c2_i32 : i32
    %c0_i32 = arith.constant 0 : i32
    %1 = arith.addi %0, %c0_i32 : i32
    %cst = arith.constant 0.000000e+00 : f32
    %2 = vector.broadcast %cst : f32 to vector<1x128xf32>
    %cst_0 = arith.constant 0.000000e+00 : f32
    %3 = vector.broadcast %cst_0 : f32 to vector<1x1xf32>
    %4 = arith.index_cast %1 : i32 to index
    %c0 = arith.constant 0 : index
    %5 = memref.load %arg1[%4, %c0] : memref<8x8xi32, #tpu.memory_space<smem>>
    %6 = arith.index_cast %5 : i32 to index
    %c0_1 = arith.constant 0 : index
    %7 = vector.load %arg3[%6, %c0_1] : memref<64x128xf32, #tpu.memory_space<vmem>>, vector<1x128xf32>
    %c0_2 = arith.constant 0 : index
    %c0_3 = arith.constant 0 : index
    %c0_4 = arith.constant 0 : index
    %8 = vector.load %arg4[%c0_2, %c0_3, %c0_4] : memref<2x8x128xf32, #tpu.memory_space<vmem>>, vector<1x1x128xf32>
    %9 = vector.shape_cast %8 : vector<1x1x128xf32> to vector<1x128xf32>
    %10 = vector.shape_cast %7 : vector<1x128xf32> to vector<1x1x128xf32>
    tpu.vector_store %arg4[%c0_2, %c0_3, %c0_4], %10 {strides = array<i32>} : memref<2x8x128xf32, #tpu.memory_space<vmem>>, vector<1x1x128xf32>,
    %11 = arith.index_cast %1 : i32 to index
    %c0_5 = arith.constant 0 : index
    %12 = memref.load %arg2[%11, %c0_5] : memref<8x8xi32, #tpu.memory_space<smem>>
    %13 = arith.sitofp %12 : i32 to f32
    %14 = vector.broadcast %13 : f32 to vector<1x128xf32>
    %15 = arith.mulf %14, %7 : vector<1x128xf32>
    %16 = arith.addf %2, %15 : vector<1x128xf32>
    %17 = vector.broadcast %13 : f32 to vector<1x1xf32>
    %18 = arith.addf %3, %17 : vector<1x1xf32>
    %19 = arith.index_cast %1 : i32 to index
    %c1 = arith.constant 1 : index
    %20 = memref.load %arg1[%19, %c1] : memref<8x8xi32, #tpu.memory_space<smem>>
    %21 = arith.index_cast %20 : i32 to index
    %c0_6 = arith.constant 0 : index
    %22 = vector.load %arg3[%21, %c0_6] : memref<64x128xf32, #tpu.memory_space<vmem>>, vector<1x128xf32>
    %c0_7 = arith.constant 0 : index
    %c1_8 = arith.constant 1 : index
    %c0_9 = arith.constant 0 : index
    %23 = vector.load %arg4[%c0_7, %c1_8, %c0_9] : memref<2x8x128xf32, #tpu.memory_space<vmem>>, vector<1x1x128xf32>
    %24 = vector.shape_cast %23 : vector<1x1x128xf32> to vector<1x128xf32>
    %25 = vector.shape_cast %22 : vector<1x128xf32> to vector<1x1x128xf32>
    tpu.vector_store %arg4[%c0_7, %c1_8, %c0_9], %25 {strides = array<i32>} : memref<2x8x128xf32, #tpu.memory_space<vmem>>, vector<1x1x128xf32>,
    %26 = arith.index_cast %1 : i32 to index
    %c1_10 = arith.constant 1 : index
    %27 = memref.load %arg2[%26, %c1_10] : memref<8x8xi32, #tpu.memory_space<smem>>
    %28 = arith.sitofp %27 : i32 to f32
    %29 = vector.broadcast %28 : f32 to vector<1x128xf32>
    %30 = arith.mulf %29, %22 : vector<1x128xf32>
    %31 = arith.addf %16, %30 : vector<1x128xf32>
    %32 = vector.broadcast %28 : f32 to vector<1x1xf32>
    %33 = arith.addf %18, %32 : vector<1x1xf32>
    %34 = arith.index_cast %1 : i32 to index
    %c2 = arith.constant 2 : index
    %35 = memref.load %arg1[%34, %c2] : memref<8x8xi32, #tpu.memory_space<smem>>
    %36 = arith.index_cast %35 : i32 to index
    %c0_11 = arith.constant 0 : index
    %37 = vector.load %arg3[%36, %c0_11] : memref<64x128xf32, #tpu.memory_space<vmem>>, vector<1x128xf32>
    %c0_12 = arith.constant 0 : index
    %c2_13 = arith.constant 2 : index
    %c0_14 = arith.constant 0 : index
    %38 = vector.load %arg4[%c0_12, %c2_13, %c0_14] : memref<2x8x128xf32, #tpu.memory_space<vmem>>, vector<1x1x128xf32>
    %39 = vector.shape_cast %38 : vector<1x1x128xf32> to vector<1x128xf32>
    %40 = vector.shape_cast %37 : vector<1x128xf32> to vector<1x1x128xf32>
    tpu.vector_store %arg4[%c0_12, %c2_13, %c0_14], %40 {strides = array<i32>} : memref<2x8x128xf32, #tpu.memory_space<vmem>>, vector<1x1x128xf32>,
    %41 = arith.index_cast %1 : i32 to index
    %c2_15 = arith.constant 2 : index
    %42 = memref.load %arg2[%41, %c2_15] : memref<8x8xi32, #tpu.memory_space<smem>>
    %43 = arith.sitofp %42 : i32 to f32
    %44 = vector.broadcast %43 : f32 to vector<1x128xf32>
    %45 = arith.mulf %44, %37 : vector<1x128xf32>
    %46 = arith.addf %31, %45 : vector<1x128xf32>
    %47 = vector.broadcast %43 : f32 to vector<1x1xf32>
    %48 = arith.addf %33, %47 : vector<1x1xf32>
    %49 = arith.index_cast %1 : i32 to index
    %c3 = arith.constant 3 : index
    %50 = memref.load %arg1[%49, %c3] : memref<8x8xi32, #tpu.memory_space<smem>>
    %51 = arith.index_cast %50 : i32 to index
    %c0_16 = arith.constant 0 : index
    %52 = vector.load %arg3[%51, %c0_16] : memref<64x128xf32, #tpu.memory_space<vmem>>, vector<1x128xf32>
    %c0_17 = arith.constant 0 : index
    %c3_18 = arith.constant 3 : index
    %c0_19 = arith.constant 0 : index
    %53 = vector.load %arg4[%c0_17, %c3_18, %c0_19] : memref<2x8x128xf32, #tpu.memory_space<vmem>>, vector<1x1x128xf32>
    %54 = vector.shape_cast %53 : vector<1x1x128xf32> to vector<1x128xf32>
    %55 = vector.shape_cast %52 : vector<1x128xf32> to vector<1x1x128xf32>
    tpu.vector_store %arg4[%c0_17, %c3_18, %c0_19], %55 {strides = array<i32>} : memref<2x8x128xf32, #tpu.memory_space<vmem>>, vector<1x1x128xf32>,
    %56 = arith.index_cast %1 : i32 to index
    %c3_20 = arith.constant 3 : index
    %57 = memref.load %arg2[%56, %c3_20] : memref<8x8xi32, #tpu.memory_space<smem>>
    %58 = arith.sitofp %57 : i32 to f32
    %59 = vector.broadcast %58 : f32 to vector<1x128xf32>
    %60 = arith.mulf %59, %52 : vector<1x128xf32>
    %61 = arith.addf %46, %60 : vector<1x128xf32>
    %62 = vector.broadcast %58 : f32 to vector<1x1xf32>
    %63 = arith.addf %48, %62 : vector<1x1xf32>
    %64 = arith.index_cast %1 : i32 to index
    %c4 = arith.constant 4 : index
    %65 = memref.load %arg1[%64, %c4] : memref<8x8xi32, #tpu.memory_space<smem>>
    %66 = arith.index_cast %65 : i32 to index
    %c0_21 = arith.constant 0 : index
    %67 = vector.load %arg3[%66, %c0_21] : memref<64x128xf32, #tpu.memory_space<vmem>>, vector<1x128xf32>
    %c0_22 = arith.constant 0 : index
    %c4_23 = arith.constant 4 : index
    %c0_24 = arith.constant 0 : index
    %68 = vector.load %arg4[%c0_22, %c4_23, %c0_24] : memref<2x8x128xf32, #tpu.memory_space<vmem>>, vector<1x1x128xf32>
    %69 = vector.shape_cast %68 : vector<1x1x128xf32> to vector<1x128xf32>
    %70 = vector.shape_cast %67 : vector<1x128xf32> to vector<1x1x128xf32>
    tpu.vector_store %arg4[%c0_22, %c4_23, %c0_24], %70 {strides = array<i32>} : memref<2x8x128xf32, #tpu.memory_space<vmem>>, vector<1x1x128xf32>,
    %71 = arith.index_cast %1 : i32 to index
    %c4_25 = arith.constant 4 : index
    %72 = memref.load %arg2[%71, %c4_25] : memref<8x8xi32, #tpu.memory_space<smem>>
    %73 = arith.sitofp %72 : i32 to f32
    %74 = vector.broadcast %73 : f32 to vector<1x128xf32>
    %75 = arith.mulf %74, %67 : vector<1x128xf32>
    %76 = arith.addf %61, %75 : vector<1x128xf32>
    %77 = vector.broadcast %73 : f32 to vector<1x1xf32>
    %78 = arith.addf %63, %77 : vector<1x1xf32>
    %79 = arith.index_cast %1 : i32 to index
    %c5 = arith.constant 5 : index
    %80 = memref.load %arg1[%79, %c5] : memref<8x8xi32, #tpu.memory_space<smem>>
    %81 = arith.index_cast %80 : i32 to index
    %c0_26 = arith.constant 0 : index
    %82 = vector.load %arg3[%81, %c0_26] : memref<64x128xf32, #tpu.memory_space<vmem>>, vector<1x128xf32>
    %c0_27 = arith.constant 0 : index
    %c5_28 = arith.constant 5 : index
    %c0_29 = arith.constant 0 : index
    %83 = vector.load %arg4[%c0_27, %c5_28, %c0_29] : memref<2x8x128xf32, #tpu.memory_space<vmem>>, vector<1x1x128xf32>
    %84 = vector.shape_cast %83 : vector<1x1x128xf32> to vector<1x128xf32>
    %85 = vector.shape_cast %82 : vector<1x128xf32> to vector<1x1x128xf32>
    tpu.vector_store %arg4[%c0_27, %c5_28, %c0_29], %85 {strides = array<i32>} : memref<2x8x128xf32, #tpu.memory_space<vmem>>, vector<1x1x128xf32>,
    %86 = arith.index_cast %1 : i32 to index
    %c5_30 = arith.constant 5 : index
    %87 = memref.load %arg2[%86, %c5_30] : memref<8x8xi32, #tpu.memory_space<smem>>
    %88 = arith.sitofp %87 : i32 to f32
    %89 = vector.broadcast %88 : f32 to vector<1x128xf32>
    %90 = arith.mulf %89, %82 : vector<1x128xf32>
    %91 = arith.addf %76, %90 : vector<1x128xf32>
    %92 = vector.broadcast %88 : f32 to vector<1x1xf32>
    %93 = arith.addf %78, %92 : vector<1x1xf32>
    %94 = arith.index_cast %1 : i32 to index
    %c6 = arith.constant 6 : index
    %95 = memref.load %arg1[%94, %c6] : memref<8x8xi32, #tpu.memory_space<smem>>
    %96 = arith.index_cast %95 : i32 to index
    %c0_31 = arith.constant 0 : index
    %97 = vector.load %arg3[%96, %c0_31] : memref<64x128xf32, #tpu.memory_space<vmem>>, vector<1x128xf32>
    %c0_32 = arith.constant 0 : index
    %c6_33 = arith.constant 6 : index
    %c0_34 = arith.constant 0 : index
    %98 = vector.load %arg4[%c0_32, %c6_33, %c0_34] : memref<2x8x128xf32, #tpu.memory_space<vmem>>, vector<1x1x128xf32>
    %99 = vector.shape_cast %98 : vector<1x1x128xf32> to vector<1x128xf32>
    %100 = vector.shape_cast %97 : vector<1x128xf32> to vector<1x1x128xf32>
    tpu.vector_store %arg4[%c0_32, %c6_33, %c0_34], %100 {strides = array<i32>} : memref<2x8x128xf32, #tpu.memory_space<vmem>>, vector<1x1x128xf32>,
    %101 = arith.index_cast %1 : i32 to index
    %c6_35 = arith.constant 6 : index
    %102 = memref.load %arg2[%101, %c6_35] : memref<8x8xi32, #tpu.memory_space<smem>>
    %103 = arith.sitofp %102 : i32 to f32
    %104 = vector.broadcast %103 : f32 to vector<1x128xf32>
    %105 = arith.mulf %104, %97 : vector<1x128xf32>
    %106 = arith.addf %91, %105 : vector<1x128xf32>
    %107 = vector.broadcast %103 : f32 to vector<1x1xf32>
    %108 = arith.addf %93, %107 : vector<1x1xf32>
    %109 = arith.index_cast %1 : i32 to index
    %c7 = arith.constant 7 : index
    %110 = memref.load %arg1[%109, %c7] : memref<8x8xi32, #tpu.memory_space<smem>>
    %111 = arith.index_cast %110 : i32 to index
    %c0_36 = arith.constant 0 : index
    %112 = vector.load %arg3[%111, %c0_36] : memref<64x128xf32, #tpu.memory_space<vmem>>, vector<1x128xf32>
    %c0_37 = arith.constant 0 : index
    %c7_38 = arith.constant 7 : index
    %c0_39 = arith.constant 0 : index
    %113 = vector.load %arg4[%c0_37, %c7_38, %c0_39] : memref<2x8x128xf32, #tpu.memory_space<vmem>>, vector<1x1x128xf32>
    %114 = vector.shape_cast %113 : vector<1x1x128xf32> to vector<1x128xf32>
    %115 = vector.shape_cast %112 : vector<1x128xf32> to vector<1x1x128xf32>
    tpu.vector_store %arg4[%c0_37, %c7_38, %c0_39], %115 {strides = array<i32>} : memref<2x8x128xf32, #tpu.memory_space<vmem>>, vector<1x1x128xf32>,
    %116 = arith.index_cast %1 : i32 to index
    %c7_40 = arith.constant 7 : index
    %117 = memref.load %arg2[%116, %c7_40] : memref<8x8xi32, #tpu.memory_space<smem>>
    %118 = arith.sitofp %117 : i32 to f32
    %119 = vector.broadcast %118 : f32 to vector<1x128xf32>
    %120 = arith.mulf %119, %112 : vector<1x128xf32>
    %121 = arith.addf %106, %120 : vector<1x128xf32>
    %122 = vector.broadcast %118 : f32 to vector<1x1xf32>
    %123 = arith.addf %108, %122 : vector<1x1xf32>
    %cst_41 = arith.constant 1.000000e+00 : f32
    %124 = vector.broadcast %cst_41 : f32 to vector<1x1xf32>
    %125 = arith.maximumf %123, %124 : vector<1x1xf32>
    %126 = tpu.reciprocal %125 : vector<1x1xf32> -> vector<1x1xf32>
    %127 = vector.broadcast %126 : vector<1x1xf32> to vector<1x128xf32>
    %128 = arith.mulf %121, %127 : vector<1x128xf32>
    %c0_42 = arith.constant 0 : index
    %c0_43 = arith.constant 0 : index
    %c0_44 = arith.constant 0 : index
    %129 = vector.load %arg5[%c0_42, %c0_43, %c0_44] : memref<2x1x128xf32, #tpu.memory_space<vmem>>, vector<1x1x128xf32>
    %130 = vector.shape_cast %129 : vector<1x1x128xf32> to vector<1x128xf32>
    %131 = vector.shape_cast %128 : vector<1x128xf32> to vector<1x1x128xf32>
    tpu.vector_store %arg5[%c0_42, %c0_43, %c0_44], %131 {strides = array<i32>} : memref<2x1x128xf32, #tpu.memory_space<vmem>>, vector<1x1x128xf32>,
    %c2_i32_45 = arith.constant 2 : i32
    %132 = arith.muli %arg0, %c2_i32_45 : i32
    %c1_i32 = arith.constant 1 : i32
    %133 = arith.addi %132, %c1_i32 : i32
    %cst_46 = arith.constant 0.000000e+00 : f32
    %134 = vector.broadcast %cst_46 : f32 to vector<1x128xf32>
    %cst_47 = arith.constant 0.000000e+00 : f32
    %135 = vector.broadcast %cst_47 : f32 to vector<1x1xf32>
    %136 = arith.index_cast %133 : i32 to index
    %c0_48 = arith.constant 0 : index
    %137 = memref.load %arg1[%136, %c0_48] : memref<8x8xi32, #tpu.memory_space<smem>>
    %138 = arith.index_cast %137 : i32 to index
    %c0_49 = arith.constant 0 : index
    %139 = vector.load %arg3[%138, %c0_49] : memref<64x128xf32, #tpu.memory_space<vmem>>, vector<1x128xf32>
    %c1_50 = arith.constant 1 : index
    %c0_51 = arith.constant 0 : index
    %c0_52 = arith.constant 0 : index
    %140 = vector.load %arg4[%c1_50, %c0_51, %c0_52] : memref<2x8x128xf32, #tpu.memory_space<vmem>>, vector<1x1x128xf32>
    %141 = vector.shape_cast %140 : vector<1x1x128xf32> to vector<1x128xf32>
    %142 = vector.shape_cast %139 : vector<1x128xf32> to vector<1x1x128xf32>
    tpu.vector_store %arg4[%c1_50, %c0_51, %c0_52], %142 {strides = array<i32>} : memref<2x8x128xf32, #tpu.memory_space<vmem>>, vector<1x1x128xf32>,
    %143 = arith.index_cast %133 : i32 to index
    %c0_53 = arith.constant 0 : index
    %144 = memref.load %arg2[%143, %c0_53] : memref<8x8xi32, #tpu.memory_space<smem>>
    %145 = arith.sitofp %144 : i32 to f32
    %146 = vector.broadcast %145 : f32 to vector<1x128xf32>
    %147 = arith.mulf %146, %139 : vector<1x128xf32>
    %148 = arith.addf %134, %147 : vector<1x128xf32>
    %149 = vector.broadcast %145 : f32 to vector<1x1xf32>
    %150 = arith.addf %135, %149 : vector<1x1xf32>
    %151 = arith.index_cast %133 : i32 to index
    %c1_54 = arith.constant 1 : index
    %152 = memref.load %arg1[%151, %c1_54] : memref<8x8xi32, #tpu.memory_space<smem>>
    %153 = arith.index_cast %152 : i32 to index
    %c0_55 = arith.constant 0 : index
    %154 = vector.load %arg3[%153, %c0_55] : memref<64x128xf32, #tpu.memory_space<vmem>>, vector<1x128xf32>
    %c1_56 = arith.constant 1 : index
    %c1_57 = arith.constant 1 : index
    %c0_58 = arith.constant 0 : index
    %155 = vector.load %arg4[%c1_56, %c1_57, %c0_58] : memref<2x8x128xf32, #tpu.memory_space<vmem>>, vector<1x1x128xf32>
    %156 = vector.shape_cast %155 : vector<1x1x128xf32> to vector<1x128xf32>
    %157 = vector.shape_cast %154 : vector<1x128xf32> to vector<1x1x128xf32>
    tpu.vector_store %arg4[%c1_56, %c1_57, %c0_58], %157 {strides = array<i32>} : memref<2x8x128xf32, #tpu.memory_space<vmem>>, vector<1x1x128xf32>,
    %158 = arith.index_cast %133 : i32 to index
    %c1_59 = arith.constant 1 : index
    %159 = memref.load %arg2[%158, %c1_59] : memref<8x8xi32, #tpu.memory_space<smem>>
    %160 = arith.sitofp %159 : i32 to f32
    %161 = vector.broadcast %160 : f32 to vector<1x128xf32>
    %162 = arith.mulf %161, %154 : vector<1x128xf32>
    %163 = arith.addf %148, %162 : vector<1x128xf32>
    %164 = vector.broadcast %160 : f32 to vector<1x1xf32>
    %165 = arith.addf %150, %164 : vector<1x1xf32>
    %166 = arith.index_cast %133 : i32 to index
    %c2_60 = arith.constant 2 : index
    %167 = memref.load %arg1[%166, %c2_60] : memref<8x8xi32, #tpu.memory_space<smem>>
    %168 = arith.index_cast %167 : i32 to index
    %c0_61 = arith.constant 0 : index
    %169 = vector.load %arg3[%168, %c0_61] : memref<64x128xf32, #tpu.memory_space<vmem>>, vector<1x128xf32>
    %c1_62 = arith.constant 1 : index
    %c2_63 = arith.constant 2 : index
    %c0_64 = arith.constant 0 : index
    %170 = vector.load %arg4[%c1_62, %c2_63, %c0_64] : memref<2x8x128xf32, #tpu.memory_space<vmem>>, vector<1x1x128xf32>
    %171 = vector.shape_cast %170 : vector<1x1x128xf32> to vector<1x128xf32>
    %172 = vector.shape_cast %169 : vector<1x128xf32> to vector<1x1x128xf32>
    tpu.vector_store %arg4[%c1_62, %c2_63, %c0_64], %172 {strides = array<i32>} : memref<2x8x128xf32, #tpu.memory_space<vmem>>, vector<1x1x128xf32>,
    %173 = arith.index_cast %133 : i32 to index
    %c2_65 = arith.constant 2 : index
    %174 = memref.load %arg2[%173, %c2_65] : memref<8x8xi32, #tpu.memory_space<smem>>
    %175 = arith.sitofp %174 : i32 to f32
    %176 = vector.broadcast %175 : f32 to vector<1x128xf32>
    %177 = arith.mulf %176, %169 : vector<1x128xf32>
    %178 = arith.addf %163, %177 : vector<1x128xf32>
    %179 = vector.broadcast %175 : f32 to vector<1x1xf32>
    %180 = arith.addf %165, %179 : vector<1x1xf32>
    %181 = arith.index_cast %133 : i32 to index
    %c3_66 = arith.constant 3 : index
    %182 = memref.load %arg1[%181, %c3_66] : memref<8x8xi32, #tpu.memory_space<smem>>
    %183 = arith.index_cast %182 : i32 to index
    %c0_67 = arith.constant 0 : index
    %184 = vector.load %arg3[%183, %c0_67] : memref<64x128xf32, #tpu.memory_space<vmem>>, vector<1x128xf32>
    %c1_68 = arith.constant 1 : index
    %c3_69 = arith.constant 3 : index
    %c0_70 = arith.constant 0 : index
    %185 = vector.load %arg4[%c1_68, %c3_69, %c0_70] : memref<2x8x128xf32, #tpu.memory_space<vmem>>, vector<1x1x128xf32>
    %186 = vector.shape_cast %185 : vector<1x1x128xf32> to vector<1x128xf32>
    %187 = vector.shape_cast %184 : vector<1x128xf32> to vector<1x1x128xf32>
    tpu.vector_store %arg4[%c1_68, %c3_69, %c0_70], %187 {strides = array<i32>} : memref<2x8x128xf32, #tpu.memory_space<vmem>>, vector<1x1x128xf32>,
    %188 = arith.index_cast %133 : i32 to index
    %c3_71 = arith.constant 3 : index
    %189 = memref.load %arg2[%188, %c3_71] : memref<8x8xi32, #tpu.memory_space<smem>>
    %190 = arith.sitofp %189 : i32 to f32
    %191 = vector.broadcast %190 : f32 to vector<1x128xf32>
    %192 = arith.mulf %191, %184 : vector<1x128xf32>
    %193 = arith.addf %178, %192 : vector<1x128xf32>
    %194 = vector.broadcast %190 : f32 to vector<1x1xf32>
    %195 = arith.addf %180, %194 : vector<1x1xf32>
    %196 = arith.index_cast %133 : i32 to index
    %c4_72 = arith.constant 4 : index
    %197 = memref.load %arg1[%196, %c4_72] : memref<8x8xi32, #tpu.memory_space<smem>>
    %198 = arith.index_cast %197 : i32 to index
    %c0_73 = arith.constant 0 : index
    %199 = vector.load %arg3[%198, %c0_73] : memref<64x128xf32, #tpu.memory_space<vmem>>, vector<1x128xf32>
    %c1_74 = arith.constant 1 : index
    %c4_75 = arith.constant 4 : index
    %c0_76 = arith.constant 0 : index
    %200 = vector.load %arg4[%c1_74, %c4_75, %c0_76] : memref<2x8x128xf32, #tpu.memory_space<vmem>>, vector<1x1x128xf32>
    %201 = vector.shape_cast %200 : vector<1x1x128xf32> to vector<1x128xf32>
    %202 = vector.shape_cast %199 : vector<1x128xf32> to vector<1x1x128xf32>
    tpu.vector_store %arg4[%c1_74, %c4_75, %c0_76], %202 {strides = array<i32>} : memref<2x8x128xf32, #tpu.memory_space<vmem>>, vector<1x1x128xf32>,
    %203 = arith.index_cast %133 : i32 to index
    %c4_77 = arith.constant 4 : index
    %204 = memref.load %arg2[%203, %c4_77] : memref<8x8xi32, #tpu.memory_space<smem>>
    %205 = arith.sitofp %204 : i32 to f32
    %206 = vector.broadcast %205 : f32 to vector<1x128xf32>
    %207 = arith.mulf %206, %199 : vector<1x128xf32>
    %208 = arith.addf %193, %207 : vector<1x128xf32>
    %209 = vector.broadcast %205 : f32 to vector<1x1xf32>
    %210 = arith.addf %195, %209 : vector<1x1xf32>
    %211 = arith.index_cast %133 : i32 to index
    %c5_78 = arith.constant 5 : index
    %212 = memref.load %arg1[%211, %c5_78] : memref<8x8xi32, #tpu.memory_space<smem>>
    %213 = arith.index_cast %212 : i32 to index
    %c0_79 = arith.constant 0 : index
    %214 = vector.load %arg3[%213, %c0_79] : memref<64x128xf32, #tpu.memory_space<vmem>>, vector<1x128xf32>
    %c1_80 = arith.constant 1 : index
    %c5_81 = arith.constant 5 : index
    %c0_82 = arith.constant 0 : index
    %215 = vector.load %arg4[%c1_80, %c5_81, %c0_82] : memref<2x8x128xf32, #tpu.memory_space<vmem>>, vector<1x1x128xf32>
    %216 = vector.shape_cast %215 : vector<1x1x128xf32> to vector<1x128xf32>
    %217 = vector.shape_cast %214 : vector<1x128xf32> to vector<1x1x128xf32>
    tpu.vector_store %arg4[%c1_80, %c5_81, %c0_82], %217 {strides = array<i32>} : memref<2x8x128xf32, #tpu.memory_space<vmem>>, vector<1x1x128xf32>,
    %218 = arith.index_cast %133 : i32 to index
    %c5_83 = arith.constant 5 : index
    %219 = memref.load %arg2[%218, %c5_83] : memref<8x8xi32, #tpu.memory_space<smem>>
    %220 = arith.sitofp %219 : i32 to f32
    %221 = vector.broadcast %220 : f32 to vector<1x128xf32>
    %222 = arith.mulf %221, %214 : vector<1x128xf32>
    %223 = arith.addf %208, %222 : vector<1x128xf32>
    %224 = vector.broadcast %220 : f32 to vector<1x1xf32>
    %225 = arith.addf %210, %224 : vector<1x1xf32>
    %226 = arith.index_cast %133 : i32 to index
    %c6_84 = arith.constant 6 : index
    %227 = memref.load %arg1[%226, %c6_84] : memref<8x8xi32, #tpu.memory_space<smem>>
    %228 = arith.index_cast %227 : i32 to index
    %c0_85 = arith.constant 0 : index
    %229 = vector.load %arg3[%228, %c0_85] : memref<64x128xf32, #tpu.memory_space<vmem>>, vector<1x128xf32>
    %c1_86 = arith.constant 1 : index
    %c6_87 = arith.constant 6 : index
    %c0_88 = arith.constant 0 : index
    %230 = vector.load %arg4[%c1_86, %c6_87, %c0_88] : memref<2x8x128xf32, #tpu.memory_space<vmem>>, vector<1x1x128xf32>
    %231 = vector.shape_cast %230 : vector<1x1x128xf32> to vector<1x128xf32>
    %232 = vector.shape_cast %229 : vector<1x128xf32> to vector<1x1x128xf32>
    tpu.vector_store %arg4[%c1_86, %c6_87, %c0_88], %232 {strides = array<i32>} : memref<2x8x128xf32, #tpu.memory_space<vmem>>, vector<1x1x128xf32>,
    %233 = arith.index_cast %133 : i32 to index
    %c6_89 = arith.constant 6 : index
    %234 = memref.load %arg2[%233, %c6_89] : memref<8x8xi32, #tpu.memory_space<smem>>
    %235 = arith.sitofp %234 : i32 to f32
    %236 = vector.broadcast %235 : f32 to vector<1x128xf32>
    %237 = arith.mulf %236, %229 : vector<1x128xf32>
    %238 = arith.addf %223, %237 : vector<1x128xf32>
    %239 = vector.broadcast %235 : f32 to vector<1x1xf32>
    %240 = arith.addf %225, %239 : vector<1x1xf32>
    %241 = arith.index_cast %133 : i32 to index
    %c7_90 = arith.constant 7 : index
    %242 = memref.load %arg1[%241, %c7_90] : memref<8x8xi32, #tpu.memory_space<smem>>
    %243 = arith.index_cast %242 : i32 to index
    %c0_91 = arith.constant 0 : index
    %244 = vector.load %arg3[%243, %c0_91] : memref<64x128xf32, #tpu.memory_space<vmem>>, vector<1x128xf32>
    %c1_92 = arith.constant 1 : index
    %c7_93 = arith.constant 7 : index
    %c0_94 = arith.constant 0 : index
    %245 = vector.load %arg4[%c1_92, %c7_93, %c0_94] : memref<2x8x128xf32, #tpu.memory_space<vmem>>, vector<1x1x128xf32>
    %246 = vector.shape_cast %245 : vector<1x1x128xf32> to vector<1x128xf32>
    %247 = vector.shape_cast %244 : vector<1x128xf32> to vector<1x1x128xf32>
    tpu.vector_store %arg4[%c1_92, %c7_93, %c0_94], %247 {strides = array<i32>} : memref<2x8x128xf32, #tpu.memory_space<vmem>>, vector<1x1x128xf32>,
    %248 = arith.index_cast %133 : i32 to index
    %c7_95 = arith.constant 7 : index
    %249 = memref.load %arg2[%248, %c7_95] : memref<8x8xi32, #tpu.memory_space<smem>>
    %250 = arith.sitofp %249 : i32 to f32
    %251 = vector.broadcast %250 : f32 to vector<1x128xf32>
    %252 = arith.mulf %251, %244 : vector<1x128xf32>
    %253 = arith.addf %238, %252 : vector<1x128xf32>
    %254 = vector.broadcast %250 : f32 to vector<1x1xf32>
    %255 = arith.addf %240, %254 : vector<1x1xf32>
    %cst_96 = arith.constant 1.000000e+00 : f32
    %256 = vector.broadcast %cst_96 : f32 to vector<1x1xf32>
    %257 = arith.maximumf %255, %256 : vector<1x1xf32>
    %258 = tpu.reciprocal %257 : vector<1x1xf32> -> vector<1x1xf32>
    %259 = vector.broadcast %258 : vector<1x1xf32> to vector<1x128xf32>
    %260 = arith.mulf %253, %259 : vector<1x128xf32>
    %c1_97 = arith.constant 1 : index
    %c0_98 = arith.constant 0 : index
    %c0_99 = arith.constant 0 : index
    %261 = vector.load %arg5[%c1_97, %c0_98, %c0_99] : memref<2x1x128xf32, #tpu.memory_space<vmem>>, vector<1x1x128xf32>
    %262 = vector.shape_cast %261 : vector<1x1x128xf32> to vector<1x128xf32>
    %263 = vector.shape_cast %260 : vector<1x128xf32> to vector<1x1x128xf32>
    tpu.vector_store %arg5[%c1_97, %c0_98, %c0_99], %263 {strides = array<i32>} : memref<2x1x128xf32, #tpu.memory_space<vmem>>, vector<1x1x128xf32>,
    return
  }
  func.func @transform_0(%arg0: i32, %arg1: memref<8x8xi32, #tpu.memory_space<smem>>, %arg2: memref<8x8xi32, #tpu.memory_space<smem>>) -> (i32, i32) {
    %c0_i32 = arith.constant 0 : i32
    %c0_i32_0 = arith.constant 0 : i32
    %c0_i32_1 = arith.constant 0 : i32
    return %c0_i32, %c0_i32_0 : i32, i32
  }
  func.func @transform_1(%arg0: i32, %arg1: memref<8x8xi32, #tpu.memory_space<smem>>, %arg2: memref<8x8xi32, #tpu.memory_space<smem>>) -> (i32, i32, i32) {
    %c0_i32 = arith.constant 0 : i32
    %c0_i32_0 = arith.constant 0 : i32
    %c0_i32_1 = arith.constant 0 : i32
    return %arg0, %c0_i32, %c0_i32_0 : i32, i32, i32
  }
  func.func @transform_2(%arg0: i32, %arg1: memref<8x8xi32, #tpu.memory_space<smem>>, %arg2: memref<8x8xi32, #tpu.memory_space<smem>>) -> (i32, i32, i32) {
    %c0_i32 = arith.constant 0 : i32
    %c0_i32_0 = arith.constant 0 : i32
    %c0_i32_1 = arith.constant 0 : i32
    return %arg0, %c0_i32, %c0_i32_0 : i32, i32, i32
  }
}

</mosaic_0001>

<llo_original>
// kernel: tpu_custom_call.1
$region0: #{tpu_custom_call.1}
  #allocation0 [shape = 'u32[]', space=smem, size = 0x4, offset = 0x4, fixed_abs, tag = 'smem constant byte address 0x4 - core index']
  #allocation1 [shape = 'u32[144,128]{1,0:T(1,128)}', space=vmem, size = 0x12000, scoped, tag = 'internal scratch']
  #allocation2 [shape = 's32[1]{0}', space=sflag, size = 0x4, scoped, tag = 'scoped memory for tpu_custom_call.1']
  #allocation3 [shape = 'u8[4096]{0}', space=smem, size = 0x1000, scoped, tag = 'prefetched SMEM operand 0']
  #allocation4 [shape = 'u8[4096]{0}', space=smem, size = 0x1000, scoped, tag = 'prefetched SMEM operand 1']
  %s0 = inlined_call_operand.hbm [shape: s32[8,8], index: 0, kind: input, shape index: {}]
  %s1 = inlined_call_operand.hbm [shape: s32[8,8], index: 1, kind: input, shape index: {}]
  %s2 = inlined_call_operand.hbm [shape: f32[64,128], index: 2, kind: input, shape index: {}]
  %s3 = inlined_call_operand.hbm [shape: f32[8,8,128], index: 3, kind: output, shape index: {0}]
  %s4 = inlined_call_operand.hbm [shape: f32[8,1,128], index: 4, kind: output, shape index: {1}]
  %5 = xla_tuple %s3, %s4
  %s6 = sld [smem:[#allocation0]]
  $region49: #{tpu_custom_call.1} parent=0
    _
  %s8 = ssub.s32 1, %s6
  %s9 = scalar_select 0, %s8, %s6
  %11 = dma.hbm_to_smem %s0, 128, [#allocation3], [#allocation2]
  %13 = dma.hbm_to_smem %s1, 128, [#allocation4], [#allocation2]
  %14 = dma.done [#allocation2], 256
  %15 = sfence
  $region1: #{tpu_custom_call.1} parent=0
    #allocation5 [shape = 'u8[32768]{0}', space=vmem, size = 0x8000, scoped, tag = 'input window, operand 2, single buffered']
    #allocation6 [shape = 's32[2]{0}', space=sflag, size = 0x8, scoped, tag = 'scoped memory for tpu_custom_call.1']
    #allocation7 [shape = 's32[2]{0}', space=sflag, size = 0x8, scoped, tag = 'scoped memory for tpu_custom_call.1']
    #allocation8 [shape = 'u8[16384]{0}', space=vmem, size = 0x4000, scoped, tag = 'output window, operand 0']
    #allocation9 [shape = 'u8[2048]{0}', space=vmem, size = 0x800, scoped, tag = 'output window, operand 1']
    #allocation10 [shape = 's32[2]{0}', space=sflag, size = 0x8, scoped, tag = 'scoped memory for tpu_custom_call.1']
    %16 = vsyncpa [#allocation6], 0
    %17 = vsyncpa [#allocation7], 0
    %s18 = scalar_lea.sflag [#allocation7], 1
    %19 = vsyncpa %s18, 0
    %20 = vsyncpa [#allocation10], 0
    %s21 = scalar_lea.sflag [#allocation10], 1
    %22 = vsyncpa %s21, 0
    loop: start=0, step=1, limit=6
    $region2: #{tpu_custom_call.1} parent=1 // loop_pre_header
      _
    $region3: #{tpu_custom_call.1} parent=1 // loop_header
      %s24 = sphi 0, %s28
      %p25 = scmp.ge.s32.totalorder %s24, 6
      %s32 = sphi 0, %s32
      %s34 = sphi 0, %s32
      %s35 = sphi 0, %s34
      %s49 = sphi 0, %s35
      %s55 = sphi 0, %s57
      %s58 = sphi 0, %s55
      %s59 = sphi 0, %s58
      %s75 = sphi 0, %s59
      %s81 = sphi 0, %s83
      %s84 = sphi 0, %s81
      %s85 = sphi 0, %s84
      %s101 = sphi 0, %s85
    $region4: #{tpu_custom_call.1} parent=1 // loop_header_branch
      %27 = sbr.rel (%p25) target = $region8
    $region5: #{tpu_custom_call.1} parent=1 // loop_body
      %s29 = ssub.s32 %s24, 1
      %s30 = ssub.s32 %s24, 2
      %s31 = sadd.s32 %s24, 1
      %s33 = sadd.s32 %s32, 1
      %p36 = scmp.eq.s32.totalorder %s24, 3
      %p37 = scmp.ne.s32.totalorder %s32, %s34
      %p38 = scmp.eq.s32.totalorder %s24, 0
      %p39 = por %p37, %p38
      %p40 = scmp.ne.s32.totalorder %s32, %s34
      %p41 = scmp.eq.s32.totalorder %s29, 3
      %p42 = por %p40, %p41
      %p43 = scmp.ne.s32.totalorder %s34, %s35
      %p44 = scmp.eq.s32.totalorder %s29, 0
      %p45 = por %p43, %p44
      %p46 = scmp.ne.s32.totalorder %s34, %s35
      %p47 = scmp.eq.s32.totalorder %s30, 3
      %p48 = por %p46, %p47
      %p50 = scmp.ne.s32.totalorder %s35, %s49
      %p51 = scmp.eq.s32.totalorder %s30, 0
      %p52 = por %p50, %p51
      %s53 = ssub.s32 %s24, %s31
      %p54 = scmp.eq.s32.totalorder %s53, 0
      %s56 = sadd.s32 %s55, 1
      %s57 = scalar_select %p54, %s55, %s56
      %p60 = pneg %p54
      %p61 = scmp.eq.s32.totalorder %s24, 3
      %p62 = por %p60, %p61
      %p63 = scmp.ne.s32.totalorder %s55, %s58
      %p64 = scmp.eq.s32.totalorder %s24, 0
      %p65 = por %p63, %p64
      %p66 = scmp.ne.s32.totalorder %s55, %s58
      %p67 = scmp.eq.s32.totalorder %s29, 3
      %p68 = por %p66, %p67
      %p69 = scmp.ne.s32.totalorder %s58, %s59
      %p70 = scmp.eq.s32.totalorder %s29, 0
      %p71 = por %p69, %p70
      %p72 = scmp.ne.s32.totalorder %s58, %s59
      %p73 = scmp.eq.s32.totalorder %s30, 3
      %p74 = por %p72, %p73
      %p76 = scmp.ne.s32.totalorder %s59, %s75
      %p77 = scmp.eq.s32.totalorder %s30, 0
      %p78 = por %p76, %p77
      %s79 = ssub.s32 %s24, %s31
      %p80 = scmp.eq.s32.totalorder %s79, 0
      %s82 = sadd.s32 %s81, 1
      %s83 = scalar_select %p80, %s81, %s82
      %p86 = pneg %p80
      %p87 = scmp.eq.s32.totalorder %s24, 3
      %p88 = por %p86, %p87
      %p89 = scmp.ne.s32.totalorder %s81, %s84
      %p90 = scmp.eq.s32.totalorder %s24, 0
      %p91 = por %p89, %p90
      %p92 = scmp.ne.s32.totalorder %s81, %s84
      %p93 = scmp.eq.s32.totalorder %s29, 3
      %p94 = por %p92, %p93
      %p95 = scmp.ne.s32.totalorder %s84, %s85
      %p96 = scmp.eq.s32.totalorder %s29, 0
      %p97 = por %p95, %p96
      %p98 = scmp.ne.s32.totalorder %s84, %s85
      %p99 = scmp.eq.s32.totalorder %s30, 3
      %p100 = por %p98, %p99
      %p102 = scmp.ne.s32.totalorder %s85, %s101
      %p103 = scmp.eq.s32.totalorder %s30, 0
      %p104 = por %p102, %p103
      %p105 = scmp.le.s32.totalorder 1, %s24
      %p106 = scmp.lt.s32.totalorder %s24, 5
      %p107 = pnand %p105, %p106
      %p108 = pneg %p107
      // Predicated region
      $region9: #{tpu_custom_call.1} parent=5 // pred_check
        _
      $region10: #{tpu_custom_call.1} parent=5 // pred_check_branch
        %110 = sbr.rel (%p107) target = $region12
      $region11: #{tpu_custom_call.1} parent=5 // pred_region
        %s111 = ssub.s32 %s24, 1
        // Predicated region
        $region13: #{tpu_custom_call.1} parent=11 // pred_check
          %p112 = pneg %p45
        $region14: #{tpu_custom_call.1} parent=11 // pred_check_branch
          %114 = sbr.rel (%p112) target = $region16
        $region15: #{tpu_custom_call.1} parent=11 // pred_region
          %s116 = ssub.s32 1024, 1024
          %117 = vsyncadd [#allocation6], %s116
          %s118 = sshll.u32 [#allocation5], 4
          %s119 = int_to_ptr.vmem [resolvable:$true] %s118
          %124 = dma.hbm_to_vmem [thread:$0]  %s2, 1024, %s119, [#allocation6], 128, 128, 8
        $region16: #{tpu_custom_call.1} parent=11 // pred_fallthru
          _
      $region12: #{tpu_custom_call.1} parent=5 // pred_fallthru
        _
      %p125 = scmp.lt.s32.totalorder %s24, 4
      // Predicated region
      $region17: #{tpu_custom_call.1} parent=5 // pred_check
        %p126 = pneg %p125
      $region18: #{tpu_custom_call.1} parent=5 // pred_check_branch
        %128 = sbr.rel (%p126) target = $region20
      $region19: #{tpu_custom_call.1} parent=5 // pred_region
        _
      $region20: #{tpu_custom_call.1} parent=5 // pred_fallthru
        _
      %p129 = scmp.le.s32.totalorder 1, %s24
      %p130 = scmp.lt.s32.totalorder %s24, 5
      %p131 = pnand %p129, %p130
      %p132 = pneg %p131
      // Predicated region
      $region21: #{tpu_custom_call.1} parent=5 // pred_check
        _
      $region22: #{tpu_custom_call.1} parent=5 // pred_check_branch
        %134 = sbr.rel (%p131) target = $region24
      $region23: #{tpu_custom_call.1} parent=5 // pred_region
        %s135 = ssub.s32 %s24, 1
        // Predicated region
        $region25: #{tpu_custom_call.1} parent=23 // pred_check
          %p136 = pneg %p45
        $region26: #{tpu_custom_call.1} parent=23 // pred_check_branch
          %138 = sbr.rel (%p136) target = $region28
        $region27: #{tpu_custom_call.1} parent=23 // pred_region
          %139 = dma.done [#allocation6], 1024
        $region28: #{tpu_custom_call.1} parent=23 // pred_fallthru
          _
        %p140 = pneg %p45
        %p141 = pneg %p42
        %p142 = pneg %p71
        %p143 = pneg %p68
        %s144 = sand.u32 %s58, 1
        %s145 = scalar_lea.sflag [#allocation7], %s144
        %s146 = sand.u32 %s58, 1
        %s147 = smul.addr %s146, 16
        %s148 = scalar_lea.vmem [#allocation8], %s147
        %p149 = pneg %p97
        %p150 = pneg %p94
        %s151 = sand.u32 %s84, 1
        %s152 = scalar_lea.sflag [#allocation10], %s151
        %s153 = sand.u32 %s84, 1
        %s154 = smul.addr %s153, 2
        %s155 = scalar_lea.vmem [#allocation9], %s154
        %s156 = smul.u32 2, %s29
        %s157 = smul.u32 2, %s29
        %s158 = smul.u32 %s29, 2
        %s159 = smul.u32 %s158, 128
        %s160 = sld [smem:[#allocation3 + %s159]]
        %s161 = scalar_lea.vmem [#allocation5], %s160
        %v162 = vld [vmem:[%s161] sm:$0x1]
        %163 = vst [vmem:[%s148] sm:$0x1] %v162
        %s164 = sld [smem:[#allocation4 + %s159]]
        %s165 = scvt.s32.f32 %s164
        %v166 = vstv %s165
        %v167 = vmul.f32 %v166, %v162
        %v168 = vadd.f32 %v167, 0.0
        %v169 = vadd.f32 %v166, 0.0
        %s170 = sadd.s32 %s159, 1
        %s171 = sld [smem:[#allocation3 + %s170]]
        %s172 = scalar_lea.vmem [#allocation5], %s171
        %v173 = vld [vmem:[%s172] sm:$0x1]
        %174 = vst [vmem:[%s148 + $0x1] sm:$0x1] %v173
        %s175 = sld [smem:[#allocation4 + %s170]]
        %s176 = scvt.s32.f32 %s175
        %v177 = vstv %s176
        %v178 = vmul.f32 %v177, %v173
        %v179 = vadd.f32 %v168, %v178
        %v180 = vadd.f32 %v169, %v177
        %s181 = sadd.s32 %s159, 2
        %s182 = sld [smem:[#allocation3 + %s181]]
        %s183 = scalar_lea.vmem [#allocation5], %s182
        %v184 = vld [vmem:[%s183] sm:$0x1]
        %185 = vst [vmem:[%s148 + $0x2] sm:$0x1] %v184
        %s186 = sld [smem:[#allocation4 + %s181]]
        %s187 = scvt.s32.f32 %s186
        %v188 = vstv %s187
        %v189 = vmul.f32 %v188, %v184
        %v190 = vadd.f32 %v179, %v189
        %v191 = vadd.f32 %v180, %v188
        %s192 = sadd.s32 %s159, 3
        %s193 = sld [smem:[#allocation3 + %s192]]
        %s194 = scalar_lea.vmem [#allocation5], %s193
        %v195 = vld [vmem:[%s194] sm:$0x1]
        %196 = vst [vmem:[%s148 + $0x3] sm:$0x1] %v195
        %s197 = sld [smem:[#allocation4 + %s192]]
        %s198 = scvt.s32.f32 %s197
        %v199 = vstv %s198
        %v200 = vmul.f32 %v199, %v195
        %v201 = vadd.f32 %v190, %v200
        %v202 = vadd.f32 %v191, %v199
        %s203 = sadd.s32 %s159, 4
        %s204 = sld [smem:[#allocation3 + %s203]]
        %s205 = scalar_lea.vmem [#allocation5], %s204
        %v206 = vld [vmem:[%s205] sm:$0x1]
        %207 = vst [vmem:[%s148 + $0x4] sm:$0x1] %v206
        %s208 = sld [smem:[#allocation4 + %s203]]
        %s209 = scvt.s32.f32 %s208
        %v210 = vstv %s209
        %v211 = vmul.f32 %v210, %v206
        %v212 = vadd.f32 %v201, %v211
        %v213 = vadd.f32 %v202, %v210
        %s214 = sadd.s32 %s159, 5
        %s215 = sld [smem:[#allocation3 + %s214]]
        %s216 = scalar_lea.vmem [#allocation5], %s215
        %v217 = vld [vmem:[%s216] sm:$0x1]
        %218 = vst [vmem:[%s148 + $0x5] sm:$0x1] %v217
        %s219 = sld [smem:[#allocation4 + %s214]]
        %s220 = scvt.s32.f32 %s219
        %v221 = vstv %s220
        %v222 = vmul.f32 %v221, %v217
        %v223 = vadd.f32 %v212, %v222
        %v224 = vadd.f32 %v213, %v221
        %s225 = sadd.s32 %s159, 6
        %s226 = sld [smem:[#allocation3 + %s225]]
        %s227 = scalar_lea.vmem [#allocation5], %s226
        %v228 = vld [vmem:[%s227] sm:$0x1]
        %229 = vst [vmem:[%s148 + $0x6] sm:$0x1] %v228
        %s230 = sld [smem:[#allocation4 + %s225]]
        %s231 = scvt.s32.f32 %s230
        %v232 = vstv %s231
        %v233 = vmul.f32 %v232, %v228
        %v234 = vadd.f32 %v223, %v233
        %v235 = vadd.f32 %v224, %v232
        %s236 = sadd.s32 %s159, 7
        %s237 = sld [smem:[#allocation3 + %s236]]
        %s238 = scalar_lea.vmem [#allocation5], %s237
        %v239 = vld [vmem:[%s238] sm:$0x1]
        %240 = vst [vmem:[%s148 + $0x7] sm:$0x1] %v239
        %s241 = sld [smem:[#allocation4 + %s236]]
        %s242 = scvt.s32.f32 %s241
        %v243 = vstv %s242
        %v244 = vmul.f32 %v243, %v239
        %v245 = vadd.f32 %v234, %v244
        %v246 = vadd.f32 %v235, %v243
        %v247 = vmax.f32 %v246, 1.0
        %v248 = vrcp.pop %v247
        %v249 = vmul.f32 %v245, %v248
        %250 = vst [vmem:[%s155] sm:$0x1] %v249
        %s251 = sadd.s32 %s158, 1
        %s252 = smul.u32 %s251, 128
        %s253 = sld [smem:[#allocation3 + %s252]]
        %s254 = scalar_lea.vmem [#allocation5], %s253
        %v255 = vld [vmem:[%s254] sm:$0x1]
        %s256 = scalar_lea.vmem %s148, 8 [#allocation8]
        %257 = vst [vmem:[%s256] sm:$0x1] %v255
        %s258 = sld [smem:[#allocation4 + %s252]]
        %s259 = scvt.s32.f32 %s258
        %v260 = vstv %s259
        %v261 = vmul.f32 %v260, %v255
        %v262 = vadd.f32 %v261, 0.0
        %v263 = vadd.f32 %v260, 0.0
        %s264 = sadd.s32 %s252, 1
        %s265 = sld [smem:[#allocation3 + %s264]]
        %s266 = scalar_lea.vmem [#allocation5], %s265
        %v267 = vld [vmem:[%s266] sm:$0x1]
        %268 = vst [vmem:[%s256 + $0x1] sm:$0x1] %v267
        %s269 = sld [smem:[#allocation4 + %s264]]
        %s270 = scvt.s32.f32 %s269
        %v271 = vstv %s270
        %v272 = vmul.f32 %v271, %v267
        %v273 = vadd.f32 %v262, %v272
        %v274 = vadd.f32 %v263, %v271
        %s275 = sadd.s32 %s252, 2
        %s276 = sld [smem:[#allocation3 + %s275]]
        %s277 = scalar_lea.vmem [#allocation5], %s276
        %v278 = vld [vmem:[%s277] sm:$0x1]
        %279 = vst [vmem:[%s256 + $0x2] sm:$0x1] %v278
        %s280 = sld [smem:[#allocation4 + %s275]]
        %s281 = scvt.s32.f32 %s280
        %v282 = vstv %s281
        %v283 = vmul.f32 %v282, %v278
        %v284 = vadd.f32 %v273, %v283
        %v285 = vadd.f32 %v274, %v282
        %s286 = sadd.s32 %s252, 3
        %s287 = sld [smem:[#allocation3 + %s286]]
        %s288 = scalar_lea.vmem [#allocation5], %s287
        %v289 = vld [vmem:[%s288] sm:$0x1]
        %290 = vst [vmem:[%s256 + $0x3] sm:$0x1] %v289
        %s291 = sld [smem:[#allocation4 + %s286]]
        %s292 = scvt.s32.f32 %s291
        %v293 = vstv %s292
        %v294 = vmul.f32 %v293, %v289
        %v295 = vadd.f32 %v284, %v294
        %v296 = vadd.f32 %v285, %v293
        %s297 = sadd.s32 %s252, 4
        %s298 = sld [smem:[#allocation3 + %s297]]
        %s299 = scalar_lea.vmem [#allocation5], %s298
        %v300 = vld [vmem:[%s299] sm:$0x1]
        %301 = vst [vmem:[%s256 + $0x4] sm:$0x1] %v300
        %s302 = sld [smem:[#allocation4 + %s297]]
        %s303 = scvt.s32.f32 %s302
        %v304 = vstv %s303
        %v305 = vmul.f32 %v304, %v300
        %v306 = vadd.f32 %v295, %v305
        %v307 = vadd.f32 %v296, %v304
        %s308 = sadd.s32 %s252, 5
        %s309 = sld [smem:[#allocation3 + %s308]]
        %s310 = scalar_lea.vmem [#allocation5], %s309
        %v311 = vld [vmem:[%s310] sm:$0x1]
        %312 = vst [vmem:[%s256 + $0x5] sm:$0x1] %v311
        %s313 = sld [smem:[#allocation4 + %s308]]
        %s314 = scvt.s32.f32 %s313
        %v315 = vstv %s314
        %v316 = vmul.f32 %v315, %v311
        %v317 = vadd.f32 %v306, %v316
        %v318 = vadd.f32 %v307, %v315
        %s319 = sadd.s32 %s252, 6
        %s320 = sld [smem:[#allocation3 + %s319]]
        %s321 = scalar_lea.vmem [#allocation5], %s320
        %v322 = vld [vmem:[%s321] sm:$0x1]
        %323 = vst [vmem:[%s256 + $0x6] sm:$0x1] %v322
        %s324 = sld [smem:[#allocation4 + %s319]]
        %s325 = scvt.s32.f32 %s324
        %v326 = vstv %s325
        %v327 = vmul.f32 %v326, %v322
        %v328 = vadd.f32 %v317, %v327
        %v329 = vadd.f32 %v318, %v326
        %s330 = sadd.s32 %s252, 7
        %s331 = sld [smem:[#allocation3 + %s330]]
        %s332 = scalar_lea.vmem [#allocation5], %s331
        %v333 = vld [vmem:[%s332] sm:$0x1]
        %334 = vst [vmem:[%s256 + $0x7] sm:$0x1] %v333
        %s335 = sld [smem:[#allocation4 + %s330]]
        %s336 = scvt.s32.f32 %s335
        %v337 = vstv %s336
        %v338 = vmul.f32 %v337, %v333
        %v339 = vadd.f32 %v328, %v338
        %v340 = vadd.f32 %v329, %v337
        %v341 = vmax.f32 %v340, 1.0
        %v342 = vrcp.pop %v341
        %v343 = vmul.f32 %v339, %v342
        %s344 = scalar_lea.vmem %s155, 1 [#allocation9]
        %345 = vst [vmem:[%s344] sm:$0x1] %v343
        %s346 = sand.u32 %s58, 1
        %s347 = scalar_lea.sflag [#allocation7], %s346
        %s348 = sand.u32 %s58, 1
        %s349 = smul.addr %s348, 16
        %s350 = scalar_lea.vmem [#allocation8], %s349
        %s351 = sand.u32 %s84, 1
        %s352 = scalar_lea.sflag [#allocation10], %s351
        %s353 = sand.u32 %s84, 1
        %s354 = smul.addr %s353, 2
        %s355 = scalar_lea.vmem [#allocation9], %s354
        // Predicated region
        $region29: #{tpu_custom_call.1} parent=23 // pred_check
          %p356 = pneg %p68
        $region30: #{tpu_custom_call.1} parent=23 // pred_check_branch
          %358 = sbr.rel (%p356) target = $region32
        $region31: #{tpu_custom_call.1} parent=23 // pred_region
          %s359 = smul.u32 2, %s29
          %s361 = ssub.s32 256, 256
          %362 = vsyncadd %s347, %s361
          %s363 = smul.addr %s359, 128
          %s364 = scalar_lea.hbm %s3, %s363
          %s365 = sshll.u32 %s350, 4
          %s366 = int_to_ptr.vmem [resolvable:$true] %s365
          %371 = dma.vmem_to_hbm [thread:$0]  %s366, 256, %s364, %s347, 128, 128, 8
        $region32: #{tpu_custom_call.1} parent=23 // pred_fallthru
          _
        // Predicated region
        $region33: #{tpu_custom_call.1} parent=23 // pred_check
          %p372 = pneg %p94
        $region34: #{tpu_custom_call.1} parent=23 // pred_check_branch
          %374 = sbr.rel (%p372) target = $region36
        $region35: #{tpu_custom_call.1} parent=23 // pred_region
          %s375 = smul.u32 2, %s29
          %s377 = ssub.s32 32, 32
          %378 = vsyncadd %s352, %s377
          %s379 = smul.addr %s375, 16
          %s380 = scalar_lea.hbm %s4, %s379
          %s381 = sshll.u32 %s355, 4
          %s382 = int_to_ptr.vmem [resolvable:$true] %s381
          %387 = dma.vmem_to_hbm [thread:$0]  %s382, 32, %s380, %s352, 16, 16, 1
        $region36: #{tpu_custom_call.1} parent=23 // pred_fallthru
          _
      $region24: #{tpu_custom_call.1} parent=5 // pred_fallthru
        _
      %p388 = scmp.le.s32.totalorder 2, %s24
      // Predicated region
      $region37: #{tpu_custom_call.1} parent=5 // pred_check
        %p389 = pneg %p388
      $region38: #{tpu_custom_call.1} parent=5 // pred_check_branch
        %391 = sbr.rel (%p389) target = $region40
      $region39: #{tpu_custom_call.1} parent=5 // pred_region
        %s392 = ssub.s32 %s24, 2
        // Predicated region
        $region41: #{tpu_custom_call.1} parent=39 // pred_check
          %p393 = pneg %p74
        $region42: #{tpu_custom_call.1} parent=39 // pred_check_branch
          %395 = sbr.rel (%p393) target = $region44
        $region43: #{tpu_custom_call.1} parent=39 // pred_region
          %s396 = sand.u32 %s59, 1
          %s397 = scalar_lea.sflag [#allocation7], %s396
          %s398 = sand.u32 %s59, 1
          %s399 = smul.addr %s398, 16
          %s400 = scalar_lea.vmem [#allocation8], %s399
          %401 = dma.done %s397, 256
        $region44: #{tpu_custom_call.1} parent=39 // pred_fallthru
          _
        // Predicated region
        $region45: #{tpu_custom_call.1} parent=39 // pred_check
          %p402 = pneg %p100
        $region46: #{tpu_custom_call.1} parent=39 // pred_check_branch
          %404 = sbr.rel (%p402) target = $region48
        $region47: #{tpu_custom_call.1} parent=39 // pred_region
          %s405 = sand.u32 %s85, 1
          %s406 = scalar_lea.sflag [#allocation10], %s405
          %s407 = sand.u32 %s85, 1
          %s408 = smul.addr %s407, 2
          %s409 = scalar_lea.vmem [#allocation9], %s408
          %410 = dma.done %s406, 32
        $region48: #{tpu_custom_call.1} parent=39 // pred_fallthru
          _
      $region40: #{tpu_custom_call.1} parent=5 // pred_fallthru
        _
    $region6: #{tpu_custom_call.1} parent=1 // loop_footer
      %s28 = sadd.s32 1, %s24
    $region7: #{tpu_custom_call.1} parent=1 // loop_footer_branch
      %23 = sbr.rel target = $region3
    $region8: #{tpu_custom_call.1} parent=1 // loop_exit
      _
    %411 = vsyncpa [#allocation6], 1
    %s412 = scalar_lea.sflag [#allocation6], 1
    %413 = vsyncpa %s412, 1
    %414 = vsyncpa [#allocation7], 1
    %s415 = scalar_lea.sflag [#allocation7], 1
    %416 = vsyncpa %s415, 1
    %417 = vsyncpa [#allocation10], 1
    %s418 = scalar_lea.sflag [#allocation10], 1
    %419 = vsyncpa %s418, 1

</llo_original>
